<compile_context>
chip_gen: v7x
topology: tpu7x:2x2x1
jax: 0.10.0
libtpu: 0.0.40
codegen_flags: <defaults>
</compile_context>

<pallas_src>
import functools

import jax
import jax.numpy as jnp
from jax import lax
from jax.experimental import pallas as pl
from jax.experimental.pallas import tpu as pltpu

_LANE = 128
_SUBLANE = 8
_ROW_BLOCK_MAX = 1024     # rows per VMEM block before the row-tiling axis kicks in


def _cdiv(a, b):
    return -(-a // b)


def _round_up(a, b):
    return _cdiv(a, b) * b


def _tpu_config():
    """(cores to split the lane range over, per-input block budget bytes,
    vmem_limit_bytes or None)."""
    kind = ""
    try:
        dev = jax.devices()[0]
        if dev.platform == "tpu":
            kind = dev.device_kind.lower()
    except Exception:
        pass

    cores, budget, vmem_limit = 1, 2 << 20, None              # safe default
    if ("v5 lite" in kind) or ("v5e" in kind) or ("v5lite" in kind):
        cores, budget, vmem_limit = 1, 2 << 20, None          # 16 MiB scoped default
    elif "v6" in kind:                                        # Trillium: 1 TC / 128 MiB VMEM
        cores, budget, vmem_limit = 1, 6 << 20, 64 << 20
    elif ("v7" in kind) or ("7x" in kind):                    # 2 TCs/chip, 64 MiB VMEM each
        cores, budget, vmem_limit = 2, 4 << 20, 48 << 20
    elif ("v5p" in kind) or kind.endswith("v5") or ("v4" in kind):   # megacore
        cores, budget, vmem_limit = 2, 4 << 20, 64 << 20

    try:  # refine against the actual per-core VMEM capacity when queryable
        vmem_cap = int(pltpu.get_tpu_info().vmem_capacity_bytes)
        budget = min(budget, max(512 * 1024, vmem_cap // 16))
    except Exception:
        pass
    return cores, budget, vmem_limit


def _sse_rows_kernel(yt_ref, yp_ref, rows_ref, acc_ref, *,
                     steps, tn, m_valid, need_mask):
    """Streams lane tiles of (y_true - y_pred)^2, accumulating per-row sums.

    yt_ref, yp_ref : (r_blk, tn) input tiles (native dtype; upcast in-kernel)
    rows_ref       : (r_blk, 1) f32 per-core output slice (written once)
    acc_ref        : (r_blk, 1) f32 VMEM accumulator over the reduction axis
    """
    k = pl.program_id(2)

    @pl.when(k == 0)
    def _init():
        acc_ref[...] = jnp.zeros_like(acc_ref)

    d = yt_ref[...].astype(jnp.float32) - yp_ref[...].astype(jnp.float32)
    d2 = d * d
    if need_mask:
        # The last lane tile of each row is partially out of bounds and its
        # padding lanes hold garbage -> zero every lane past the true width.
        # `base` is the *logical* lane offset, so even a fully out-of-range
        # (clamped/duplicated) tile contributes exactly 0.
        c = pl.program_id(0)
        base = (c * steps + k) * tn
        lane = lax.broadcasted_iota(jnp.int32, d2.shape, 1)
        d2 = jnp.where(lane + base < m_valid, d2, 0.0)
    acc_ref[...] += jnp.sum(d2, axis=-1, keepdims=True)

    @pl.when(k == steps - 1)
    def _finish():
        rows_ref[...] = acc_ref[...]


def _per_sample_sse(yt2, yp2, block_bytes=None):
    """sum_n (y_true[b, n] - y_pred[b, n])^2 per batch row.  yt2/yp2: (B, N)."""
    B, N = yt2.shape
    cores, budget, vmem_limit = _tpu_config()
    if block_bytes is not None:
        budget = int(block_bytes)

    # Sublane-dense relayout when B < 8, but only when it is a free
    # metadata-only reshape (no pad / no copy): each sample becomes `sub`
    # consecutive rows of width N // sub so f32 vregs (8 sublanes) fill up.
    sub = 1
    if B < _SUBLANE:
        for s in (8, 4, 2):
            if N % s == 0:
                sub = s
                break
    R, M = B * sub, N // sub
    yt2 = yt2.reshape(R, M)
    yp2 = yp2.reshape(R, M)

    # Row tiling (only matters for very large B): keeps the lane tile large
    # instead of shrinking it toward 128 under the VMEM budget.
    if R <= _ROW_BLOCK_MAX:
        r_blk, r_tiles = R, 1
    else:
        r_blk, r_tiles = _ROW_BLOCK_MAX, _cdiv(R, _ROW_BLOCK_MAX)

    # Lane tile: as large as the per-generation block budget allows (sized in
    # f32 to stay conservative for narrow dtypes and sublane padding).
    r_pad = _round_up(r_blk, _SUBLANE)
    tn_budget = max(_LANE, (budget // (r_pad * 4)) // _LANE * _LANE)

    if M <= tn_budget:
        tn, blocks_total = M, 1          # single full-width block per row tile
    else:
        tn = tn_budget
        blocks_total = _cdiv(M, tn)

    # Split the lane-block range across TensorCores only when it divides
    # evenly (avoids issuing fully out-of-range block indices).
    if blocks_total % cores != 0:
        cores = 1
    cores = max(1, min(cores, blocks_total))
    steps = blocks_total // cores
    need_mask = (blocks_total * tn != M)

    kernel = functools.partial(_sse_rows_kernel, steps=steps, tn=tn,
                               m_valid=M, need_mask=need_mask)

    in_spec = pl.BlockSpec((r_blk, tn), lambda c, r, k: (r, c * steps + k))
    out_spec = pl.BlockSpec((None, r_blk, 1), lambda c, r, k: (c, r, 0))

    bytes_in = yt2.dtype.itemsize + yp2.dtype.itemsize
    cost = pl.CostEstimate(flops=3 * R * M, transcendentals=0,
                           bytes_accessed=R * M * bytes_in + cores * R * 4)

    rows = pl.pallas_call(
        kernel,
        grid=(cores, r_tiles, steps),
        in_specs=[in_spec, in_spec],
        out_specs=out_spec,
        out_shape=jax.ShapeDtypeStruct((cores, R, 1), jnp.float32),
        scratch_shapes=[pltpu.VMEM((r_blk, 1), jnp.float32)],
        compiler_params=pltpu.CompilerParams(
            dimension_semantics=("parallel", "parallel", "arbitrary"),
            vmem_limit_bytes=vmem_limit),
        cost_estimate=cost,
    )(yt2, yp2)

    # (cores, B*sub, 1) -> per-batch totals: sum core partials and sub-rows.
    return jnp.sum(rows.reshape(cores, B, sub), axis=(0, 2))


def mixed_loss(y_true, y_pred, std, *, alpha, eps=0.1, block_bytes=None):
    """JAX/Pallas equivalent of MixedLoss(alpha).forward(y_true, y_pred, std).

    y_true, y_pred: (B, T, F) (or any (B, ...)); std: (B,).  Scalar f32 loss.
    """
    B = y_true.shape[0]
    yt2 = jnp.asarray(y_true).reshape(B, -1)      # native dtype (bf16 streams as bf16)
    yp2 = jnp.asarray(y_pred).reshape(B, -1)
    std1 = jnp.asarray(std, jnp.float32).reshape(B)
    N = yt2.shape[1]

    sse_b = _per_sample_sse(yt2, yp2, block_bytes)       # (B,) f32
    count = jnp.float32(B * N)

    mean_mse = jnp.sum(sse_b) / count                    # mean of the MSE map
    w = 1.0 / (std1 + jnp.float32(eps)) ** 2             # NSE weights (exact)
    nse = jnp.sum(w * sse_b) / count                     # scalar NSELoss
    # mean(alpha*mse_map + (1-alpha)*|nse-1|) == alpha*mean(mse) + (1-alpha)*|nse-1|
    return alpha * mean_mse + (1.0 - alpha) * jnp.abs(nse - 1.0)


def _reference(y_true, y_pred, std, alpha, eps=0.1):
    """Pure-JAX mirror of the PyTorch forward (computed in f32) for checking."""
    y_true = jnp.asarray(y_true, jnp.float32)
    y_pred = jnp.asarray(y_pred, jnp.float32)
    std = jnp.asarray(std, jnp.float32)
    se = (y_true - y_pred) ** 2
    w = (1.0 / (std + eps) ** 2).reshape((-1,) + (1,) * (se.ndim - 1))
    nse = jnp.mean(w * se)
    mixed = alpha * se + (1.0 - alpha) * jnp.abs(nse - 1.0)
    return jnp.mean(mixed)


if __name__ == "__main__":
    key = jax.random.PRNGKey(0)
    alpha = 0.5

    cases = [
        # (B, T, F, dtype, block_bytes override)
        (2, 8, 1, jnp.float32, None),            # B<8, free sub-row relayout, tiny M
        (4, 365, 1, jnp.float32, None),          # B<8, odd N, full-width single block
        (8, 4200, 1, jnp.float32, None),         # B>=8, full-width single-step block
        (8, 5000, 1, jnp.float32, 16 * 1024),    # multi-step streaming + tail mask
        (4, 2056, 1, jnp.bfloat16, 16 * 1024),   # bf16 in-kernel upcast + relayout + mask
        (2048, 16, 1, jnp.float32, None),        # large B: row-tiling axis
    ]

    ok = True
    for idx, (B, T, F, dtype, bb) in enumerate(cases):
        k1, k2, k3, key = jax.random.split(key, 4)
        y_true = jax.random.normal(k1, (B, T, F), dtype=jnp.float32).astype(dtype)
        y_pred = jax.random.normal(k2, (B, T, F), dtype=jnp.float32).astype(dtype)
        std = jax.random.uniform(k3, (B,), dtype=jnp.float32,
                                 minval=0.5, maxval=2.0)

        loss = jax.block_until_ready(
            mixed_loss(y_true, y_pred, std, alpha=alpha, block_bytes=bb))
        ref = jax.block_until_ready(_reference(y_true, y_pred, std, alpha))
        if not jnp.allclose(loss, ref, rtol=1e-4, atol=1e-5):
            ok = False
            print(f"MISMATCH case {idx}: kernel={loss} ref={ref}")

    assert ok
    print("KERNEL_OK")
</pallas_src>

<mosaic_0001>
module attributes {stable_mosaic.version = 11 : i64} {
  func.func @_sse_rows_kernel(%arg0: i32, %arg1: i32, %arg2: i32, %arg3: memref<16x1xf32, #tpu.memory_space<vmem>>, %arg4: memref<16x1xf32, #tpu.memory_space<vmem>>, %arg5: memref<1x16x1xf32, #tpu.memory_space<vmem>>, %arg6: memref<16x1xf32, #tpu.memory_space<vmem>>) attributes {dimension_semantics = [#tpu.dimension_semantics<parallel>, #tpu.dimension_semantics<parallel>, #tpu.dimension_semantics<arbitrary>], iteration_bounds = array<i64: 1, 1, 1>, scalar_prefetch = 0 : i64, scratch_operands = 1 : i64, tpu.core_type = #tpu.core_type<tc>, window_params = [{transform_indices = @transform_0, window_bounds = array<i64: 16, 1>}, {transform_indices = @transform_1, window_bounds = array<i64: 16, 1>}, {transform_indices = @transform_2, window_bounds = array<i64: 1, 16, 1>}]} {
    %c0_i32 = arith.constant 0 : i32
    %0 = arith.cmpi eq, %arg2, %c0_i32 : i32
    %1 = arith.extui %0 : i1 to i32
    %c0_i32_0 = arith.constant 0 : i32
    %2 = arith.cmpi ne, %1, %c0_i32_0 : i32
    scf.if %2 {
      %cst_10 = arith.constant 0.000000e+00 : f32
      %15 = vector.broadcast %cst_10 : f32 to vector<16x1xf32>
      %c0_11 = arith.constant 0 : index
      %c0_12 = arith.constant 0 : index
      %16 = vector.load %arg6[%c0_11, %c0_12] : memref<16x1xf32, #tpu.memory_space<vmem>>, vector<16x1xf32>
      tpu.vector_store %arg6[%c0_11, %c0_12], %15 {strides = array<i32>} : memref<16x1xf32, #tpu.memory_space<vmem>>, vector<16x1xf32>,
    } else {
    }
    %c0 = arith.constant 0 : index
    %c0_1 = arith.constant 0 : index
    %3 = vector.load %arg3[%c0, %c0_1] : memref<16x1xf32, #tpu.memory_space<vmem>>, vector<16x1xf32>
    %c0_2 = arith.constant 0 : index
    %c0_3 = arith.constant 0 : index
    %4 = vector.load %arg4[%c0_2, %c0_3] : memref<16x1xf32, #tpu.memory_space<vmem>>, vector<16x1xf32>
    %5 = arith.subf %3, %4 : vector<16x1xf32>
    %6 = arith.mulf %5, %5 : vector<16x1xf32>
    %c0_4 = arith.constant 0 : index
    %c0_5 = arith.constant 0 : index
    %7 = vector.load %arg6[%c0_4, %c0_5] : memref<16x1xf32, #tpu.memory_space<vmem>>, vector<16x1xf32>
    %cst = arith.constant dense<0.000000e+00> : vector<16xf32>
    %8 = vector.multi_reduction <add>, %6, %cst [1] : vector<16x1xf32> to vector<16xf32>
    %9 = vector.shape_cast %8 : vector<16xf32> to vector<16x1xf32>
    %10 = arith.addf %7, %9 : vector<16x1xf32>
    %c0_6 = arith.constant 0 : index
    %c0_7 = arith.constant 0 : index
    %11 = vector.load %arg6[%c0_6, %c0_7] : memref<16x1xf32, #tpu.memory_space<vmem>>, vector<16x1xf32>
    tpu.vector_store %arg6[%c0_6, %c0_7], %10 {strides = array<i32>} : memref<16x1xf32, #tpu.memory_space<vmem>>, vector<16x1xf32>,
    %c0_i32_8 = arith.constant 0 : i32
    %12 = arith.cmpi eq, %arg2, %c0_i32_8 : i32
    %13 = arith.extui %12 : i1 to i32
    %c0_i32_9 = arith.constant 0 : i32
    %14 = arith.cmpi ne, %13, %c0_i32_9 : i32
    scf.if %14 {
      %c0_10 = arith.constant 0 : index
      %c0_11 = arith.constant 0 : index
      %15 = vector.load %arg6[%c0_10, %c0_11] : memref<16x1xf32, #tpu.memory_space<vmem>>, vector<16x1xf32>
      %c0_12 = arith.constant 0 : index
      %c0_13 = arith.constant 0 : index
      %c0_14 = arith.constant 0 : index
      %16 = vector.load %arg5[%c0_12, %c0_13, %c0_14] : memref<1x16x1xf32, #tpu.memory_space<vmem>>, vector<1x16x1xf32>
      %17 = vector.shape_cast %16 : vector<1x16x1xf32> to vector<16x1xf32>
      %18 = vector.shape_cast %15 : vector<16x1xf32> to vector<1x16x1xf32>
      tpu.vector_store %arg5[%c0_12, %c0_13, %c0_14], %18 {strides = array<i32>} : memref<1x16x1xf32, #tpu.memory_space<vmem>>, vector<1x16x1xf32>,
    } else {
    }
    return
  }
  func.func @transform_0(%arg0: i32, %arg1: i32, %arg2: i32) -> (i32, i32) {
    %c1_i32 = arith.constant 1 : i32
    %0 = arith.muli %arg0, %c1_i32 : i32
    %1 = arith.addi %0, %arg2 : i32
    %c0_i32 = arith.constant 0 : i32
    return %arg1, %1 : i32, i32
  }
  func.func @transform_1(%arg0: i32, %arg1: i32, %arg2: i32) -> (i32, i32) {
    %c1_i32 = arith.constant 1 : i32
    %0 = arith.muli %arg0, %c1_i32 : i32
    %1 = arith.addi %0, %arg2 : i32
    %c0_i32 = arith.constant 0 : i32
    return %arg1, %1 : i32, i32
  }
  func.func @transform_2(%arg0: i32, %arg1: i32, %arg2: i32) -> (i32, i32, i32) {
    %c0_i32 = arith.constant 0 : i32
    %c0_i32_0 = arith.constant 0 : i32
    return %arg0, %arg1, %c0_i32 : i32, i32, i32
  }
}

</mosaic_0001>

<llo_original>
// kernel: tpu_custom_call.1
$region0: #{tpu_custom_call.1}
  #allocation0 [shape = 'u32[]', space=smem, size = 0x4, offset = 0x4, fixed_abs, tag = 'smem constant byte address 0x4 - core index']
  #allocation1 [shape = 'u32[144,128]{1,0:T(1,128)}', space=vmem, size = 0x12000, scoped, tag = 'internal scratch']
  #allocation2 [shape = 'f32[16,1]{1,0:T(8,128)}', space=vmem, size = 0x2000, scoped, tag = 'scratch operand']
  %s0 = inlined_call_operand.vmem [shape: f32[16,1], index: 0, kind: input, shape index: {}]
  %s1 = inlined_call_operand.vmem [shape: f32[16,1], index: 1, kind: input, shape index: {}]
  %s2 = inlined_call_operand.vmem [shape: f32[1,16,1], index: 2, kind: output, shape index: {}]
  %s3 = sld [smem:[#allocation0]]
  $region26: #{tpu_custom_call.1} parent=0
    _
  %s5 = ssub.s32 1, %s3
  %s6 = scalar_select 0, %s5, %s3
  // Predicated region
  $region2: #{tpu_custom_call.1} parent=0 // pred_check
    _
  $region3: #{tpu_custom_call.1} parent=0 // pred_check_branch
    %8 = sbr.rel (0) target = $region5
  $region4: #{tpu_custom_call.1} parent=0 // pred_region
    %s9 = sadd.s32 0, 0
    %p10 = scmp.lt.s32.totalorder %s9, 0
    %s11 = scalar_select %p10, %s9, 0
    %s12 = smul.addr %s11, 8
    %s13 = scalar_lea.vmem %s0, %s12
    %s14 = sadd.s32 0, 0
  $region5: #{tpu_custom_call.1} parent=0 // pred_fallthru
    _
  // Predicated region
  $region6: #{tpu_custom_call.1} parent=0 // pred_check
    _
  $region7: #{tpu_custom_call.1} parent=0 // pred_check_branch
    %16 = sbr.rel (0) target = $region9
  $region8: #{tpu_custom_call.1} parent=0 // pred_region
    %s17 = sadd.s32 0, 0
    %p18 = scmp.lt.s32.totalorder %s17, 0
    %s19 = scalar_select %p18, %s17, 0
    %s20 = smul.addr %s19, 8
    %s21 = scalar_lea.vmem %s1, %s20
    %s22 = sadd.s32 0, 0
  $region9: #{tpu_custom_call.1} parent=0 // pred_fallthru
    _
  %s23 = sadd.s32 0, 0
  %p24 = scmp.lt.s32.totalorder %s23, 0
  %s25 = scalar_select %p24, %s23, 0
  %s26 = smul.addr %s25, 8
  %s27 = scalar_lea.vmem %s0, %s26
  %s28 = sadd.s32 0, 0
  %p29 = scmp.lt.s32.totalorder %s28, 0
  %s30 = scalar_select %p29, %s28, 0
  %s31 = smul.addr %s30, 8
  %s32 = scalar_lea.vmem %s1, %s31
  %s33 = sadd.s32 0, 0
  %p34 = scmp.lt.s32.totalorder %s33, 0
  %s35 = scalar_select %p34, %s33, 0
  %s36 = smul.addr %s35, 8
  %s37 = scalar_lea.vmem %s0, %s36
  %s38 = sadd.s32 0, 0
  %s39 = sadd.s32 0, 0
  %p40 = scmp.lt.s32.totalorder %s39, 0
  %s41 = scalar_select %p40, %s39, 0
  %s42 = smul.addr %s41, 8
  %s43 = scalar_lea.vmem %s1, %s42
  %s44 = sadd.s32 0, 0
  %p45 = scmp.eq.s32.totalorder 0, 0
  // Predicated region
  $region10: #{tpu_custom_call.1} parent=0 // pred_check
    %p46 = pneg %p45
  $region11: #{tpu_custom_call.1} parent=0 // pred_check_branch
    %48 = sbr.rel (%p46) target = $region13
  $region12: #{tpu_custom_call.1} parent=0 // pred_region
    %vm49 = vcmask 7168
    %50 = vst.msk [vmem:[#allocation2] sm:$0xff] %vm49, 0.0
    %51 = vst.msk [vmem:[#allocation2 + $0x8] sm:$0xff] %vm49, 0.0
  $region13: #{tpu_custom_call.1} parent=0 // pred_fallthru
    _
  %v52 = vld [vmem:[%s37] sm:$0xff]
  %v53 = vld [vmem:[%s37 + $0x8] sm:$0xff]
  %v54 = vld [vmem:[%s43] sm:$0xff]
  %v55 = vld [vmem:[%s43 + $0x8] sm:$0xff]
  %v56 = vsub.f32 %v52, %v54
  %v57 = vsub.f32 %v53, %v55
  %v58 = vmul.f32 %v56, %v56
  %v59 = vmul.f32 %v57, %v57
  %v60 = vld [vmem:[#allocation2] sm:$0xff]
  %v61 = vld [vmem:[#allocation2 + $0x8] sm:$0xff]
  %v62 = vadd.f32 %v58, 0.0
  %v63 = vadd.f32 %v59, 0.0
  %v64 = vadd.f32 %v60, %v62
  %v65 = vadd.f32 %v61, %v63
  %vm66 = vcmask 7168
  %67 = vst.msk [vmem:[#allocation2] sm:$0xff] %vm66, %v64
  %68 = vst.msk [vmem:[#allocation2 + $0x8] sm:$0xff] %vm66, %v65
  // Predicated region
  $region14: #{tpu_custom_call.1} parent=0 // pred_check
    %p69 = pneg %p45
  $region15: #{tpu_custom_call.1} parent=0 // pred_check_branch
    %71 = sbr.rel (%p69) target = $region17
  $region16: #{tpu_custom_call.1} parent=0 // pred_region
    %v72 = vld [vmem:[#allocation2] sm:$0xff]
    %v73 = vld [vmem:[#allocation2 + $0x8] sm:$0xff]
    %74 = vst.msk [vmem:[%s2] sm:$0xff] %vm66, %v72
    %75 = vst.msk [vmem:[%s2 + $0x8] sm:$0xff] %vm66, %v73
  $region17: #{tpu_custom_call.1} parent=0 // pred_fallthru
    _
  // Predicated region
  $region18: #{tpu_custom_call.1} parent=0 // pred_check
    _
  $region19: #{tpu_custom_call.1} parent=0 // pred_check_branch
    %77 = sbr.rel (0) target = $region21
  $region20: #{tpu_custom_call.1} parent=0 // pred_region
    _
  $region21: #{tpu_custom_call.1} parent=0 // pred_fallthru
    _
  // Predicated region
  $region22: #{tpu_custom_call.1} parent=0 // pred_check
    _
  $region23: #{tpu_custom_call.1} parent=0 // pred_check_branch
    %79 = sbr.rel (0) target = $region25
  $region24: #{tpu_custom_call.1} parent=0 // pred_region
    _
  $region25: #{tpu_custom_call.1} parent=0 // pred_fallthru
    _

</llo_original>
